<compile_context>
chip_gen: v7x
topology: tpu7x:2x2x1
jax: 0.10.0
libtpu: 0.0.40
codegen_flags: <defaults>
</compile_context>

<pallas_src>
import jax
import jax.numpy as jnp
from jax import lax
from jax.experimental import pallas as pl
from jax.experimental.pallas import tpu as pltpu

BOTTLENECK_DIM = 128
BN_EPS = 1e-5
LANE = 128


def _round_up(n, m):
    return ((n + m - 1) // m) * m


def _choose_tb(B, tb_max):
    """Batch tile: minimize padding waste; prefer larger tiles on ties."""
    if B <= 128:
        return _round_up(B, 8)
    cands = [c for c in (512, 256, 128) if c <= tb_max] or [128]
    return min(cands, key=lambda c: (_round_up(B, c) - B, -c))


def _vmem_limit(nbytes):
    """Explicit scoped-VMEM request: tile footprint + headroom, clamped to the
    smallest physical VMEM across generations (v7x: 64 MiB)."""
    return int(min(max(nbytes + (2 << 20), 8 << 20), 64 << 20))


# ----------------------------------------------------------------------------
# Kernels
# ----------------------------------------------------------------------------
def _fc1_kernel(x_ref, w1_ref, h_ref):
    """Training pass A: h = x @ w1 (bf16 x bf16 -> f32 on the MXU).

    fc1 bias is omitted on purpose: it cancels exactly under the batch-mean
    subtraction of BatchNorm(train).  Padded (zero) batch rows give h == 0 and
    are sliced off before the wrapper-side statistics.
    """
    h_ref[...] = jnp.dot(x_ref[...], w1_ref[...],
                         preferred_element_type=jnp.float32)


def _emit_kernel(h_ref, scale_ref, shift_ref, w2_ref, bias_ref, out_ref):
    """Training pass B: out = ReLU(h*scale + shift) @ w2_tile + bias_tile.

    grid = (nb, nc), both axes "parallel" (no cross-iteration state).
    """
    hn = jnp.maximum(h_ref[...] * scale_ref[...] + shift_ref[...], 0.0)
    out_ref[...] = (
        jnp.dot(hn.astype(jnp.bfloat16), w2_ref[...],
                preferred_element_type=jnp.float32)
        + bias_ref[...]).astype(out_ref.dtype)


def _eval_kernel(x_ref, w1_ref, b1_ref, w2_ref, bias_ref, out_ref, h_scr):
    """Eval path: BN folded into fc1 in the wrapper.

    grid = (nb, nc) with the class axis inner ("arbitrary"): fc1 is computed
    once per batch tile (cached in VMEM scratch at j == 0), the classifier
    matmul is class-tiled.
    """
    @pl.when(pl.program_id(1) == 0)
    def _():
        h = (jnp.dot(x_ref[...], w1_ref[...],
                     preferred_element_type=jnp.float32) + b1_ref[...])
        h_scr[...] = jnp.maximum(h, 0.0).astype(jnp.bfloat16)

    out_ref[...] = (
        jnp.dot(h_scr[...], w2_ref[...], preferred_element_type=jnp.float32)
        + bias_ref[...]).astype(out_ref.dtype)


# ----------------------------------------------------------------------------
# Parameters
# ----------------------------------------------------------------------------
def init_params(key, num_features, num_classes):
    """Deterministic synthetic parameters matching the module's __init__ shapes."""
    k_w1, k_b1, k_mu, k_rm = jax.random.split(key, 4)
    bound1 = 1.0 / jnp.sqrt(jnp.float32(num_features))
    w1 = jax.random.uniform(k_w1, (num_features, BOTTLENECK_DIM),
                            minval=-bound1, maxval=bound1, dtype=jnp.float32)
    b1 = jax.random.uniform(k_b1, (BOTTLENECK_DIM,),
                            minval=-bound1, maxval=bound1, dtype=jnp.float32)
    gamma = jnp.ones((BOTTLENECK_DIM,), jnp.float32)
    beta = jnp.zeros((BOTTLENECK_DIM,), jnp.float32)
    rmean = 0.1 * jax.random.normal(k_rm, (BOTTLENECK_DIM,), dtype=jnp.float32)
    rvar = jnp.ones((BOTTLENECK_DIM,), jnp.float32)
    bound_mu = jnp.sqrt(6.0 / jnp.float32(BOTTLENECK_DIM))
    mu = jax.random.uniform(k_mu, (num_classes, BOTTLENECK_DIM),
                            minval=-bound_mu, maxval=bound_mu, dtype=jnp.float32)
    sigma = jnp.zeros((num_classes, BOTTLENECK_DIM), jnp.float32)
    bias = jnp.zeros((num_classes,), jnp.float32)
    return dict(w1=w1, b1=b1, gamma=gamma, beta=beta, rmean=rmean, rvar=rvar,
                mu=mu, sigma=sigma, bias=bias)


# ----------------------------------------------------------------------------
# Forward
# ----------------------------------------------------------------------------
def stochastic_classifier_forward(params, x, *, stochastic=True, training=True,
                                  sample_key=None, tb_max=512, tn_max=1024,
                                  out_dtype=jnp.float32):
    """Runs the fused Pallas kernels; mirrors StochasticClassifier.forward."""
    B, F = x.shape
    C = params["mu"].shape[0]
    out_isz = jnp.dtype(out_dtype).itemsize

    # Reparameterized sampling of the classifier weight (tiny elementwise glue).
    if stochastic and training:
        sig = jax.nn.softplus(params["sigma"] - 2.0)
        eps = jax.random.normal(sample_key, params["mu"].shape, dtype=jnp.float32)
        weight = params["mu"] + sig * eps          # Normal(mu, sig).rsample()
    else:
        weight = params["sigma"]                   # exactly as in the PyTorch code

    # --- Class dim: lane-dense padding + tiling (bounded VMEM for large C). ---
    Cp0 = _round_up(C, LANE)
    TN = min(Cp0, _round_up(tn_max, LANE))
    Cp = _round_up(Cp0, TN)
    nc = Cp // TN

    # --- Batch dim: tile chosen to minimize padding waste. ---
    TB = _choose_tb(B, tb_max)
    B_pad = _round_up(B, TB)
    nb = B_pad // TB

    w2 = jnp.zeros((BOTTLENECK_DIM, Cp), jnp.float32).at[:, :C].set(weight.T)
    w2 = w2.astype(jnp.bfloat16)
    bias = jnp.zeros((1, Cp), jnp.float32).at[0, :C].set(params["bias"])

    if B_pad != B:
        x = jnp.zeros((B_pad, F), x.dtype).at[:B].set(x)
    x_bf16 = x.astype(jnp.bfloat16)

    if training:
        w1 = params["w1"].astype(jnp.bfloat16)

        # ---------------- Pass A: fc1 matmul (x read once, "parallel"). ------
        vmem_a = (2 * TB * F * 2 + 2 * F * BOTTLENECK_DIM * 2
                  + 2 * TB * BOTTLENECK_DIM * 4)
        h = pl.pallas_call(
            _fc1_kernel,
            out_shape=jax.ShapeDtypeStruct((B_pad, BOTTLENECK_DIM), jnp.float32),
            grid_spec=pltpu.PrefetchScalarGridSpec(
                num_scalar_prefetch=0,
                grid=(nb,),
                in_specs=[
                    pl.BlockSpec((TB, F), lambda b: (b, 0)),                  # x tile
                    pl.BlockSpec((F, BOTTLENECK_DIM), lambda b: (0, 0)),      # w1 (resident)
                ],
                out_specs=pl.BlockSpec((TB, BOTTLENECK_DIM), lambda b: (b, 0)),
            ),
            compiler_params=pltpu.CompilerParams(
                dimension_semantics=("parallel",),
                vmem_limit_bytes=_vmem_limit(vmem_a)),
            cost_estimate=pl.CostEstimate(
                flops=2 * B_pad * F * BOTTLENECK_DIM,
                transcendentals=0,
                bytes_accessed=(B_pad * F * 2 + F * BOTTLENECK_DIM * 2
                                + B_pad * BOTTLENECK_DIM * 4)),
        )(x_bf16, w1)

        # ----- Batch statistics: numerically-stable two-pass (tiny XLA ops). -
        hb = h[:B]
        mean = jnp.mean(hb, axis=0)
        var = jnp.mean(jnp.square(hb - mean), axis=0)          # biased, like BN
        scale = params["gamma"] * lax.rsqrt(var + BN_EPS)
        shift = params["beta"] - mean * scale
        scale = scale.reshape(1, BOTTLENECK_DIM)
        shift = shift.reshape(1, BOTTLENECK_DIM)

        # ---------------- Pass B: normalize+ReLU+classifier (class-tiled). ---
        vmem_b = (2 * TB * BOTTLENECK_DIM * 4 + 2 * BOTTLENECK_DIM * TN * 2
                  + 2 * TB * TN * out_isz + 4 * BOTTLENECK_DIM * 4 * 2
                  + 2 * TN * 4)
        out = pl.pallas_call(
            _emit_kernel,
            out_shape=jax.ShapeDtypeStruct((B_pad, Cp), out_dtype),
            grid_spec=pltpu.PrefetchScalarGridSpec(
                num_scalar_prefetch=0,
                grid=(nb, nc),
                in_specs=[
                    pl.BlockSpec((TB, BOTTLENECK_DIM), lambda b, j: (b, 0)),   # h tile
                    pl.BlockSpec((1, BOTTLENECK_DIM), lambda b, j: (0, 0)),    # scale
                    pl.BlockSpec((1, BOTTLENECK_DIM), lambda b, j: (0, 0)),    # shift
                    pl.BlockSpec((BOTTLENECK_DIM, TN), lambda b, j: (0, j)),   # w2 tile
                    pl.BlockSpec((1, TN), lambda b, j: (0, j)),                # bias tile
                ],
                out_specs=pl.BlockSpec((TB, TN), lambda b, j: (b, j)),
            ),
            compiler_params=pltpu.CompilerParams(
                dimension_semantics=("parallel", "parallel"),
                vmem_limit_bytes=_vmem_limit(vmem_b)),
            cost_estimate=pl.CostEstimate(
                flops=2 * B_pad * BOTTLENECK_DIM * Cp + 3 * B_pad * BOTTLENECK_DIM,
                transcendentals=0,
                bytes_accessed=(B_pad * BOTTLENECK_DIM * 4
                                + BOTTLENECK_DIM * Cp * 2 + Cp * 4
                                + B_pad * Cp * out_isz)),
        )(h, scale, shift, w2, bias)
    else:
        # Fold BatchNorm (running stats) into fc1: w1' = w1*s, b1' = (b1-rm)*s+beta.
        bn_scale = params["gamma"] * lax.rsqrt(params["rvar"] + BN_EPS)
        w1f = (params["w1"] * bn_scale[None, :]).astype(jnp.bfloat16)
        b1f = ((params["b1"] - params["rmean"]) * bn_scale
               + params["beta"]).reshape(1, BOTTLENECK_DIM)

        vmem_e = (2 * TB * F * 2 + 2 * F * BOTTLENECK_DIM * 2
                  + 2 * BOTTLENECK_DIM * 4 + 2 * BOTTLENECK_DIM * TN * 2
                  + 2 * TN * 4 + 2 * TB * TN * out_isz
                  + TB * BOTTLENECK_DIM * 2)
        out = pl.pallas_call(
            _eval_kernel,
            out_shape=jax.ShapeDtypeStruct((B_pad, Cp), out_dtype),
            grid_spec=pltpu.PrefetchScalarGridSpec(
                num_scalar_prefetch=0,
                grid=(nb, nc),
                in_specs=[
                    pl.BlockSpec((TB, F), lambda b, j: (b, 0)),                # x tile
                    pl.BlockSpec((F, BOTTLENECK_DIM), lambda b, j: (0, 0)),    # w1 (folded)
                    pl.BlockSpec((1, BOTTLENECK_DIM), lambda b, j: (0, 0)),    # b1 (folded)
                    pl.BlockSpec((BOTTLENECK_DIM, TN), lambda b, j: (0, j)),   # w2 tile
                    pl.BlockSpec((1, TN), lambda b, j: (0, j)),                # bias tile
                ],
                out_specs=pl.BlockSpec((TB, TN), lambda b, j: (b, j)),
                scratch_shapes=[pltpu.VMEM((TB, BOTTLENECK_DIM), jnp.bfloat16)],
            ),
            compiler_params=pltpu.CompilerParams(
                dimension_semantics=("parallel", "arbitrary"),
                vmem_limit_bytes=_vmem_limit(vmem_e)),
            cost_estimate=pl.CostEstimate(
                flops=(2 * B_pad * F * BOTTLENECK_DIM
                       + 2 * B_pad * BOTTLENECK_DIM * Cp),
                transcendentals=0,
                bytes_accessed=(B_pad * F * 2 + F * BOTTLENECK_DIM * 2
                                + BOTTLENECK_DIM * Cp * 2 + Cp * 4
                                + B_pad * Cp * out_isz)),
        )(x_bf16, w1f, b1f, w2, bias)

    return out[:B, :C]


# ----------------------------------------------------------------------------
# Pure-JAX references (mirror the kernel's bf16 MXU inputs)
# ----------------------------------------------------------------------------
def _reference_forward_training(params, x, weight):
    xb = x.astype(jnp.bfloat16)
    w1b = params["w1"].astype(jnp.bfloat16)
    h = jnp.dot(xb, w1b, preferred_element_type=jnp.float32) + params["b1"]
    mean = jnp.mean(h, axis=0, keepdims=True)
    var = jnp.mean((h - mean) ** 2, axis=0, keepdims=True)
    h = (h - mean) * lax.rsqrt(var + BN_EPS) * params["gamma"] + params["beta"]
    h = jnp.maximum(h, 0.0)
    return (jnp.dot(h.astype(jnp.bfloat16), weight.T.astype(jnp.bfloat16),
                    preferred_element_type=jnp.float32) + params["bias"])


def _reference_forward_eval(params, x):
    xb = x.astype(jnp.bfloat16)
    scale = params["gamma"] * lax.rsqrt(params["rvar"] + BN_EPS)
    w1f = (params["w1"] * scale[None, :]).astype(jnp.bfloat16)
    b1f = (params["b1"] - params["rmean"]) * scale + params["beta"]
    h = jnp.maximum(jnp.dot(xb, w1f, preferred_element_type=jnp.float32) + b1f, 0.0)
    w = params["sigma"]   # PyTorch quirk: non-stochastic path uses sigma as the weight
    return (jnp.dot(h.astype(jnp.bfloat16), w.T.astype(jnp.bfloat16),
                    preferred_element_type=jnp.float32) + params["bias"])


if __name__ == "__main__":
    root = jax.random.PRNGKey(0)
    k_param, k_x, k_sample, k_param2, k_x2, k_sample2, k_sig2 = jax.random.split(root, 7)

    # ---------------- Small config (B=10 exercises batch padding). ----------
    num_features, num_classes, batch = 32, 16, 10
    params = init_params(k_param, num_features, num_classes)
    x = jax.random.normal(k_x, (batch, num_features), dtype=jnp.float32)

    score = stochastic_classifier_forward(params, x, stochastic=True,
                                          training=True, sample_key=k_sample)
    score = jax.block_until_ready(score)
    assert score.shape == (batch, num_classes)

    sig = jax.nn.softplus(params["sigma"] - 2.0)
    eps = jax.random.normal(k_sample, params["mu"].shape, dtype=jnp.float32)
    ref = _reference_forward_training(params, x, params["mu"] + sig * eps)
    tol = 1e-2 * max(1.0, float(jnp.max(jnp.abs(ref))))
    err = float(jnp.max(jnp.abs(score - ref)))
    assert err < tol, f"training-path mismatch: {err}"

    # Deterministic / eval path: weight = sigma (zeros here) -> score == bias.
    score_eval = stochastic_classifier_forward(params, x, stochastic=False,
                                               training=False)
    score_eval = jax.block_until_ready(score_eval)
    assert score_eval.shape == (batch, num_classes)
    assert float(jnp.max(jnp.abs(score_eval - params["bias"][None, :]))) < 1e-4

    # ------- Larger config exercising class tiling (nc=2) and nb>1. ---------
    num_features2, num_classes2, batch2 = 256, 1500, 300
    params2 = init_params(k_param2, num_features2, num_classes2)
    x2 = jax.random.normal(k_x2, (batch2, num_features2), dtype=jnp.float32)

    score2 = stochastic_classifier_forward(params2, x2, stochastic=True,
                                           training=True, sample_key=k_sample2)
    score2 = jax.block_until_ready(score2)
    assert score2.shape == (batch2, num_classes2)
    sig2 = jax.nn.softplus(params2["sigma"] - 2.0)
    eps2 = jax.random.normal(k_sample2, params2["mu"].shape, dtype=jnp.float32)
    ref2 = _reference_forward_training(params2, x2, params2["mu"] + sig2 * eps2)
    tol2 = 1e-2 * max(1.0, float(jnp.max(jnp.abs(ref2))))
    err2 = float(jnp.max(jnp.abs(score2 - ref2)))
    assert err2 < tol2, f"training-path (tiled) mismatch: {err2}"

    # Eval path with a nonzero sigma (used directly as the weight, per PyTorch).
    params2_eval = dict(params2)
    params2_eval["sigma"] = 0.1 * jax.random.normal(
        k_sig2, (num_classes2, BOTTLENECK_DIM), dtype=jnp.float32)
    score2_eval = stochastic_classifier_forward(params2_eval, x2,
                                                stochastic=False, training=False)
    score2_eval = jax.block_until_ready(score2_eval)
    ref2_eval = _reference_forward_eval(params2_eval, x2)
    tol2e = 1e-2 * max(1.0, float(jnp.max(jnp.abs(ref2_eval))))
    err2e = float(jnp.max(jnp.abs(score2_eval - ref2_eval)))
    assert err2e < tol2e, f"eval-path (tiled) mismatch: {err2e}"

    print("KERNEL_OK")
</pallas_src>

<mosaic_0001>
module attributes {stable_mosaic.version = 11 : i64} {
  func.func @_fc1_kernel(%arg0: i32, %arg1: memref<16x32xbf16, #tpu.memory_space<vmem>>, %arg2: memref<32x128xbf16, #tpu.memory_space<vmem>>, %arg3: memref<16x128xf32, #tpu.memory_space<vmem>>) attributes {dimension_semantics = [#tpu.dimension_semantics<parallel>], iteration_bounds = array<i64: 1>, scalar_prefetch = 0 : i64, scratch_operands = 0 : i64, tpu.core_type = #tpu.core_type<tc>, window_params = [{transform_indices = @transform_0, window_bounds = array<i64: 16, 32>}, {pipeline_mode = #tpu.pipeline_mode<synchronous>, transform_indices = @transform_1, window_bounds = array<i64: 32, 128>}, {transform_indices = @transform_2, window_bounds = array<i64: 16, 128>}]} {
    %c0 = arith.constant 0 : index
    %c0_0 = arith.constant 0 : index
    %0 = vector.load %arg1[%c0, %c0_0] : memref<16x32xbf16, #tpu.memory_space<vmem>>, vector<16x32xbf16>
    %c0_1 = arith.constant 0 : index
    %c0_2 = arith.constant 0 : index
    %1 = vector.load %arg2[%c0_1, %c0_2] : memref<32x128xbf16, #tpu.memory_space<vmem>>, vector<32x128xbf16>
    %cst = arith.constant dense<0.000000e+00> : vector<16x128xf32>
    %2 = tpu.matmul %0, %1, %cst {dimension_numbers = #tpu.dot_dimension_numbers<[1], [0], [0], [1], [0, 0, 1, 1], [], []>} : vector<16x32xbf16>, vector<32x128xbf16>, vector<16x128xf32> -> vector<16x128xf32>
    %c0_3 = arith.constant 0 : index
    %c0_4 = arith.constant 0 : index
    %3 = vector.load %arg3[%c0_3, %c0_4] : memref<16x128xf32, #tpu.memory_space<vmem>>, vector<16x128xf32>
    tpu.vector_store %arg3[%c0_3, %c0_4], %2 {strides = array<i32>} : memref<16x128xf32, #tpu.memory_space<vmem>>, vector<16x128xf32>,
    return
  }
  func.func @transform_0(%arg0: i32) -> (i32, i32) {
    %c0_i32 = arith.constant 0 : i32
    %c0_i32_0 = arith.constant 0 : i32
    return %arg0, %c0_i32 : i32, i32
  }
  func.func @transform_1(%arg0: i32) -> (i32, i32) {
    %c0_i32 = arith.constant 0 : i32
    %c0_i32_0 = arith.constant 0 : i32
    %c0_i32_1 = arith.constant 0 : i32
    return %c0_i32, %c0_i32_0 : i32, i32
  }
  func.func @transform_2(%arg0: i32) -> (i32, i32) {
    %c0_i32 = arith.constant 0 : i32
    %c0_i32_0 = arith.constant 0 : i32
    return %arg0, %c0_i32 : i32, i32
  }
}

</mosaic_0001>

<llo_original>
// kernel: tpu_custom_call.1
$region0: #{tpu_custom_call.1}
  #allocation0 [shape = 'u32[]', space=smem, size = 0x4, offset = 0x4, fixed_abs, tag = 'smem constant byte address 0x4 - core index']
  #allocation1 [shape = 'u32[144,128]{1,0:T(1,128)}', space=vmem, size = 0x12000, scoped, tag = 'internal scratch']
  %s0 = inlined_call_operand.hbm [shape: bf16[16,32], index: 0, kind: input, shape index: {}]
  %s1 = inlined_call_operand.hbm [shape: bf16[32,128], index: 1, kind: input, shape index: {}]
  %s2 = inlined_call_operand.hbm [shape: f32[16,128], index: 2, kind: output, shape index: {}]
  %s3 = sld [smem:[#allocation0]]
  $region26: #{tpu_custom_call.1} parent=0
    _
  %s5 = ssub.s32 1, %s3
  %s6 = scalar_select 0, %s5, %s3
  $region1: #{tpu_custom_call.1} parent=0
    #allocation2 [shape = 'u8[4096]{0}', space=vmem, size = 0x1000, scoped, tag = 'input window, operand 0, single buffered']
    #allocation3 [shape = 's32[1]{0}', space=sflag, size = 0x4, scoped, tag = 'scoped memory for tpu_custom_call.1']
    #allocation4 [shape = 's32[1]{0}', space=sflag, size = 0x4, scoped, tag = 'scoped memory for tpu_custom_call.1']
    #allocation5 [shape = 'u8[8192]{0}', space=vmem, size = 0x2000, scoped, tag = 'input window, operand 1, single buffered']
    #allocation6 [shape = 's32[1]{0}', space=sflag, size = 0x4, scoped, tag = 'scoped memory for tpu_custom_call.1']
    #allocation7 [shape = 'u8[8192]{0}', space=vmem, size = 0x2000, scoped, tag = 'output window, operand 0, single buffered']
    %7 = vsyncpa [#allocation3], 0
    %8 = vsyncpa [#allocation6], 0
    %9 = vsyncpa [#allocation4], 0
    // Predicated region
    $region2: #{tpu_custom_call.1} parent=1 // pred_check
      _
    $region3: #{tpu_custom_call.1} parent=1 // pred_check_branch
      %11 = sbr.rel (0) target = $region5
    $region4: #{tpu_custom_call.1} parent=1 // pred_region
      %s13 = ssub.s32 128, 128
      %14 = vsyncadd [#allocation3], %s13
      %s15 = sshll.u32 [#allocation2], 4
      %s16 = int_to_ptr.vmem [resolvable:$true] %s15
      %21 = dma.hbm_to_vmem [thread:$0]  %s0, 128, %s16, [#allocation3], 64, 64, 4
    $region5: #{tpu_custom_call.1} parent=1 // pred_fallthru
      _
    // Predicated region
    $region6: #{tpu_custom_call.1} parent=1 // pred_check
      _
    $region7: #{tpu_custom_call.1} parent=1 // pred_check_branch
      %23 = sbr.rel (0) target = $region9
    $region8: #{tpu_custom_call.1} parent=1 // pred_region
      %s25 = ssub.s32 256, 256
      %26 = vsyncadd [#allocation6], %s25
      %s27 = sshll.u32 [#allocation5], 4
      %s28 = int_to_ptr.vmem [resolvable:$true] %s27
      %33 = dma.hbm_to_vmem [thread:$0]  %s1, 256, %s28, [#allocation6], 64, 64, 4
    $region9: #{tpu_custom_call.1} parent=1 // pred_fallthru
      _
    // Predicated region
    $region10: #{tpu_custom_call.1} parent=1 // pred_check
      _
    $region11: #{tpu_custom_call.1} parent=1 // pred_check_branch
      %35 = sbr.rel (0) target = $region13
    $region12: #{tpu_custom_call.1} parent=1 // pred_region
      %36 = dma.done [#allocation3], 128
    $region13: #{tpu_custom_call.1} parent=1 // pred_fallthru
      _
    // Predicated region
    $region14: #{tpu_custom_call.1} parent=1 // pred_check
      _
    $region15: #{tpu_custom_call.1} parent=1 // pred_check_branch
      %38 = sbr.rel (0) target = $region17
    $region16: #{tpu_custom_call.1} parent=1 // pred_region
      %39 = dma.done [#allocation6], 256
    $region17: #{tpu_custom_call.1} parent=1 // pred_fallthru
      _
    %v41 = vld [vmem:[#allocation2] sm:$0xf]
    %v42 = vld [vmem:[#allocation2 + $0x4] sm:$0xf]
    %v43 = vld [vmem:[#allocation5] sm:$0xf]
    %v44 = vld [vmem:[#allocation5 + $0x4] sm:$0xf]
    %v45 = vld [vmem:[#allocation5 + $0x8] sm:$0xf]
    %v46 = vld [vmem:[#allocation5 + $0xc] sm:$0xf]
    %v49 = vunpack.c.l.b16 %v41
    %v50 = vunpack.c.l.b16 %v42
    %v51 = vpack.c.b16 %v50, %v49
    %v56 = vunpack.c.l.b16 %v43
    %v57 = vunpack.c.l.b16 %v44
    %v58 = vunpack.c.l.b16 %v45
    %v59 = vunpack.c.l.b16 %v46
    %v60 = vpack.c.b16 %v57, %v56
    %v61 = vpack.c.b16 %v59, %v58
    %vm64 = vcmask 261120
    %v66 = vsel %vm64, %v51, 0
    %68 = vmatprep.subr.bf16.mxu0 0
    %69 = vmatpush1.bf16.msra.mxu0 %v60
    %70 = vmatprep.subr.bf16.mxu0 0
    %71 = vmatpush1.bf16.msra.mxu0 %v61
    %72 = vmatprep.subr.bf16.mxu0 0
    %73 = vmatpush1.bf16.msra.mxu0 0
    %74 = vmatprep.subr.bf16.mxu0 0
    %75 = vmatpush1.bf16.msra.mxu0 0
    %76 = vmatprep.subr.bf16.mxu0 0
    %77 = vmatpush1.bf16.msra.mxu0 0
    %78 = vmatprep.subr.bf16.mxu0 0
    %79 = vmatpush1.bf16.msra.mxu0 0
    %80 = vmatprep.subr.bf16.mxu0 0
    %81 = vmatpush1.bf16.msra.mxu0 0
    %82 = vmatprep.subr.bf16.mxu0 0
    %83 = vmatpush1.bf16.msra.mxu0 0
    %84 = vmatprep.subr.bf16.mxu0 0
    %85 = vmatpush1.bf16.msra.mxu0 0
    %86 = vmatprep.subr.bf16.mxu0 0
    %87 = vmatpush1.bf16.msra.mxu0 0
    %88 = vmatprep.subr.bf16.mxu0 0
    %89 = vmatpush1.bf16.msra.mxu0 0
    %90 = vmatprep.subr.bf16.mxu0 0
    %91 = vmatpush1.bf16.msra.mxu0 0
    %92 = vmatprep.subr.bf16.mxu0 0
    %93 = vmatpush1.bf16.msra.mxu0 0
    %94 = vmatprep.subr.bf16.mxu0 0
    %95 = vmatpush1.bf16.msra.mxu0 0
    %96 = vmatprep.subr.bf16.mxu0 0
    %97 = vmatpush1.bf16.msra.mxu0 0
    %98 = vmatprep.subr.bf16.mxu0 0
    %99 = vmatpush1.bf16.msra.mxu0 0
    %100 = vmatprep.mubr.bf16.mxu0 0
    %101 = vmatmul.mubr.bf16.gmra.mrb[0].mxu0 %v66
    %v102 = vpop.f32.mrb[0].mxu0
    %v103 = vadd.f32 0.0, %v102
    %v104 = vpop.f32.mrb[0].mxu0
    %v105 = vpop.f32.mrb[0].mxu0
    %v106 = vadd.f32 0.0, %v105
    %v107 = vpop.f32.mrb[0].mxu0
    %108 = vdwg.mxu0
    %109 = vst [vmem:[#allocation7] sm:$0xff] %v103
    %110 = vst [vmem:[#allocation7 + $0x8] sm:$0xff] %v106
    // Predicated region
    $region18: #{tpu_custom_call.1} parent=1 // pred_check
      _
    $region19: #{tpu_custom_call.1} parent=1 // pred_check_branch
      %112 = sbr.rel (0) target = $region21
    $region20: #{tpu_custom_call.1} parent=1 // pred_region
      %s114 = ssub.s32 256, 256
      %115 = vsyncadd [#allocation4], %s114
      %s116 = sshll.u32 [#allocation7], 4
      %s117 = int_to_ptr.vmem [resolvable:$true] %s116
      %122 = dma.vmem_to_hbm [thread:$0]  %s117, 256, %s2, [#allocation4], 128, 128, 8
    $region21: #{tpu_custom_call.1} parent=1 // pred_fallthru
      _
    // Predicated region
    $region22: #{tpu_custom_call.1} parent=1 // pred_check
      _
    $region23: #{tpu_custom_call.1} parent=1 // pred_check_branch
      %124 = sbr.rel (0) target = $region25
    $region24: #{tpu_custom_call.1} parent=1 // pred_region
      %125 = dma.done [#allocation4], 256
    $region25: #{tpu_custom_call.1} parent=1 // pred_fallthru
      _
    %126 = vsyncpa [#allocation3], 1
    %127 = vsyncpa [#allocation6], 1
    %128 = vsyncpa [#allocation4], 1

</llo_original>
